<compile_context>
chip_gen: v7x
topology: tpu7x:2x2x1
jax: 0.10.0
libtpu: 0.0.40
codegen_flags: <defaults>
</compile_context>

<pallas_src>
import jax
import jax.numpy as jnp
from jax.experimental import pallas as pl
from jax.experimental.pallas import tpu as pltpu

# --- small config consistent with the module (config.H/W/C/P/d_model) ---
H, W, C, P, D = 16, 16, 4, 4, 32
H1, W1 = H // P, W // P
N = H1 * W1            # number of patches = 16
K = P * P * C          # flattened patch dim = 64
B = 2                  # config.batch_size


def patchnet_kernel(x_ref, w_ref, padd_ref, cls_ref, o_ref):
    # x_ref:    (B*N, K)    all batches' flattened patches stacked along rows
    # w_ref:    (K, D)      linear weight (already transposed)
    # padd_ref: (N, D)      bias + pos_embed[:N]
    # cls_ref:  (B, 1, D)   cls_token + pos_embed[N], pre-broadcast over batch
    # o_ref:    (B, N+1, D) full output slab
    emb = jnp.dot(x_ref[...], w_ref[...],
                  preferred_element_type=jnp.float32)        # one MXU pass, (B*N, D)
    emb = emb.reshape(B, N, D) + padd_ref[...][None, :, :]   # tile-aligned sublane split
    # Two direct stores: keeps the 16-row patch store unmasked on sublanes and
    # confines masking to the single cls row (no 17-row concat intermediate).
    o_ref[:, 0:N, :] = emb.astype(o_ref.dtype)
    o_ref[:, N:N + 1, :] = cls_ref[...].astype(o_ref.dtype)


def prepare_params(weight, bias, cls_token, pos_embed):
    """One-time parameter prep (amortized across calls, not per-call math).

    weight:    (D, K)      as stored by nn.Linear
    bias:      (D,)
    cls_token: (1, 1, D)
    pos_embed: (1, N+1, D)
    returns (w_t: (K, D), patch_add: (N, D), cls_slab: (B, 1, D))
    """
    pos = pos_embed.reshape(N + 1, D)
    patch_add = pos[0:N, :] + bias.reshape(1, D)                        # (N, D)
    cls_row = pos[N:N + 1, :] + cls_token.reshape(1, D)                 # (1, D)
    cls_slab = jnp.broadcast_to(cls_row[None], (B, 1, D)).astype(jnp.float32)
    return weight.T, patch_add, cls_slab


def patchnet_forward(images, w_t, patch_add, cls_slab):
    """images: (B, H, W, C) f32 -> (B, N+1, D) f32."""
    # crop (no-op for this config) + row-major flatten, mirroring torch .view();
    # (B, N) is further collapsed to B*N so the kernel runs a single matmul.
    # This reshape of a contiguous array lowers to a bitcast, not a copy.
    x = images[:, 0:H1 * P, 0:W1 * P, :].reshape(B * N, K)
    cost = pl.CostEstimate(
        flops=2 * B * N * K * D,
        transcendentals=0,
        bytes_accessed=4 * (B * N * K + K * D + N * D + B * D + B * (N + 1) * D),
    )
    return pl.pallas_call(
        patchnet_kernel,
        out_shape=jax.ShapeDtypeStruct((B, N + 1, D), jnp.float32),
        grid_spec=pltpu.PrefetchScalarGridSpec(
            num_scalar_prefetch=0,
            grid=(1,),   # single step: entire working set (~20 KiB) fits in VMEM
            in_specs=[
                pl.BlockSpec((B * N, K), lambda i: (0, 0)),
                pl.BlockSpec((K, D), lambda i: (0, 0)),
                pl.BlockSpec((N, D), lambda i: (0, 0)),
                pl.BlockSpec((B, 1, D), lambda i: (0, 0, 0)),
            ],
            out_specs=pl.BlockSpec((B, N + 1, D), lambda i: (0, 0, 0)),
        ),
        compiler_params=pltpu.CompilerParams(
            dimension_semantics=("arbitrary",)),
        cost_estimate=cost,
    )(x, w_t, patch_add, cls_slab)


def patchnet_reference(images, weight, bias, cls_token, pos_embed):
    """Direct (non-fused) port of the PyTorch forward for verification."""
    x = images[:, 0:H1 * P, 0:W1 * P, :].reshape(B, N, K)
    emb = x @ weight.T + bias                               # (B, N, D)
    cls = jnp.broadcast_to(cls_token, (B, 1, D))
    out = jnp.concatenate([emb, cls], axis=1)               # (B, N+1, D)
    return pos_embed + out


if __name__ == "__main__":
    key = jax.random.PRNGKey(0)
    k_img, k_w, k_b, k_cls, k_pos = jax.random.split(key, 5)

    images = jax.random.normal(k_img, (B, H, W, C), dtype=jnp.float32)

    # Deterministic parameter init in the same layout PyTorch stores them.
    # Note: the PyTorch module initializes pos_embed / cls_token to zeros;
    # small random values are used here to exercise the add / cls-copy paths.
    weight = jax.random.normal(k_w, (D, K), dtype=jnp.float32) * 0.02
    bias = jax.random.normal(k_b, (D,), dtype=jnp.float32) * 0.02
    cls_token = jax.random.normal(k_cls, (1, 1, D), dtype=jnp.float32) * 0.02
    pos_embed = jax.random.normal(k_pos, (1, N + 1, D), dtype=jnp.float32) * 0.02

    # One-time parameter prep (weight transpose + bias/pos fold + cls slab).
    w_t, patch_add, cls_slab = prepare_params(weight, bias, cls_token, pos_embed)

    out = patchnet_forward(images, w_t, patch_add, cls_slab)
    out = jax.block_until_ready(out)

    ref = patchnet_reference(images, weight, bias, cls_token, pos_embed)
    assert out.shape == (B, N + 1, D), out.shape
    assert jnp.allclose(out, ref, atol=1e-5, rtol=1e-5), "mismatch vs reference"

    print("KERNEL_OK")
</pallas_src>

<mosaic_0001>
module attributes {stable_mosaic.version = 11 : i64} {
  func.func @patchnet_kernel(%arg0: i32, %arg1: memref<32x64xf32, #tpu.memory_space<vmem>>, %arg2: memref<64x32xf32, #tpu.memory_space<vmem>>, %arg3: memref<16x32xf32, #tpu.memory_space<vmem>>, %arg4: memref<2x1x32xf32, #tpu.memory_space<vmem>>, %arg5: memref<2x17x32xf32, #tpu.memory_space<vmem>>) attributes {dimension_semantics = [#tpu.dimension_semantics<arbitrary>], iteration_bounds = array<i64: 1>, scalar_prefetch = 0 : i64, scratch_operands = 0 : i64, tpu.core_type = #tpu.core_type<tc>, window_params = [{pipeline_mode = #tpu.pipeline_mode<synchronous>, transform_indices = @transform_0, window_bounds = array<i64: 32, 64>}, {pipeline_mode = #tpu.pipeline_mode<synchronous>, transform_indices = @transform_1, window_bounds = array<i64: 64, 32>}, {pipeline_mode = #tpu.pipeline_mode<synchronous>, transform_indices = @transform_2, window_bounds = array<i64: 16, 32>}, {pipeline_mode = #tpu.pipeline_mode<synchronous>, transform_indices = @transform_3, window_bounds = array<i64: 2, 1, 32>}, {pipeline_mode = #tpu.pipeline_mode<synchronous>, transform_indices = @transform_4, window_bounds = array<i64: 2, 17, 32>}]} {
    %c0 = arith.constant 0 : index
    %c0_0 = arith.constant 0 : index
    %0 = vector.load %arg1[%c0, %c0_0] : memref<32x64xf32, #tpu.memory_space<vmem>>, vector<32x64xf32>
    %c0_1 = arith.constant 0 : index
    %c0_2 = arith.constant 0 : index
    %1 = vector.load %arg2[%c0_1, %c0_2] : memref<64x32xf32, #tpu.memory_space<vmem>>, vector<64x32xf32>
    %cst = arith.constant dense<0.000000e+00> : vector<32x32xf32>
    %2 = tpu.matmul %0, %1, %cst {dimension_numbers = #tpu.dot_dimension_numbers<[1], [0], [0], [1], [0, 0, 1, 1], [], []>} : vector<32x64xf32>, vector<64x32xf32>, vector<32x32xf32> -> vector<32x32xf32>
    %3 = vector.shape_cast %2 : vector<32x32xf32> to vector<2x16x32xf32>
    %c0_3 = arith.constant 0 : index
    %c0_4 = arith.constant 0 : index
    %4 = vector.load %arg3[%c0_3, %c0_4] : memref<16x32xf32, #tpu.memory_space<vmem>>, vector<16x32xf32>
    %5 = vector.shape_cast %4 : vector<16x32xf32> to vector<1x16x32xf32>
    %6 = vector.broadcast %5 : vector<1x16x32xf32> to vector<2x16x32xf32>
    %7 = arith.addf %3, %6 : vector<2x16x32xf32>
    %c0_5 = arith.constant 0 : index
    %c0_6 = arith.constant 0 : index
    %c0_7 = arith.constant 0 : index
    %8 = vector.load %arg5[%c0_5, %c0_6, %c0_7] : memref<2x17x32xf32, #tpu.memory_space<vmem>>, vector<2x16x32xf32>
    tpu.vector_store %arg5[%c0_5, %c0_6, %c0_7], %7 {strides = array<i32>} : memref<2x17x32xf32, #tpu.memory_space<vmem>>, vector<2x16x32xf32>,
    %c0_8 = arith.constant 0 : index
    %c0_9 = arith.constant 0 : index
    %c0_10 = arith.constant 0 : index
    %9 = vector.load %arg4[%c0_8, %c0_9, %c0_10] : memref<2x1x32xf32, #tpu.memory_space<vmem>>, vector<2x1x32xf32>
    %c0_11 = arith.constant 0 : index
    %c16 = arith.constant 16 : index
    %c0_12 = arith.constant 0 : index
    %10 = vector.load %arg5[%c0_11, %c16, %c0_12] : memref<2x17x32xf32, #tpu.memory_space<vmem>>, vector<2x1x32xf32>
    tpu.vector_store %arg5[%c0_11, %c16, %c0_12], %9 {strides = array<i32>} : memref<2x17x32xf32, #tpu.memory_space<vmem>>, vector<2x1x32xf32>,
    return
  }
  func.func @transform_0(%arg0: i32) -> (i32, i32) {
    %c0_i32 = arith.constant 0 : i32
    %c0_i32_0 = arith.constant 0 : i32
    %c0_i32_1 = arith.constant 0 : i32
    return %c0_i32, %c0_i32_0 : i32, i32
  }
  func.func @transform_1(%arg0: i32) -> (i32, i32) {
    %c0_i32 = arith.constant 0 : i32
    %c0_i32_0 = arith.constant 0 : i32
    %c0_i32_1 = arith.constant 0 : i32
    return %c0_i32, %c0_i32_0 : i32, i32
  }
  func.func @transform_2(%arg0: i32) -> (i32, i32) {
    %c0_i32 = arith.constant 0 : i32
    %c0_i32_0 = arith.constant 0 : i32
    %c0_i32_1 = arith.constant 0 : i32
    return %c0_i32, %c0_i32_0 : i32, i32
  }
  func.func @transform_3(%arg0: i32) -> (i32, i32, i32) {
    %c0_i32 = arith.constant 0 : i32
    %c0_i32_0 = arith.constant 0 : i32
    %c0_i32_1 = arith.constant 0 : i32
    %c0_i32_2 = arith.constant 0 : i32
    return %c0_i32, %c0_i32_0, %c0_i32_1 : i32, i32, i32
  }
  func.func @transform_4(%arg0: i32) -> (i32, i32, i32) {
    %c0_i32 = arith.constant 0 : i32
    %c0_i32_0 = arith.constant 0 : i32
    %c0_i32_1 = arith.constant 0 : i32
    %c0_i32_2 = arith.constant 0 : i32
    return %c0_i32, %c0_i32_0, %c0_i32_1 : i32, i32, i32
  }
}

</mosaic_0001>

<llo_original>
// kernel: tpu_custom_call.1
$region0: #{tpu_custom_call.1}
  #allocation0 [shape = 'u32[]', space=smem, size = 0x4, offset = 0x4, fixed_abs, tag = 'smem constant byte address 0x4 - core index']
  #allocation1 [shape = 'u32[144,128]{1,0:T(1,128)}', space=vmem, size = 0x12000, scoped, tag = 'internal scratch']
  %s0 = inlined_call_operand.vmem [shape: f32[32,64], index: 0, kind: input, shape index: {}]
  %s1 = inlined_call_operand.vmem [shape: f32[64,32], index: 1, kind: input, shape index: {}]
  %s2 = inlined_call_operand.vmem [shape: f32[16,32], index: 2, kind: input, shape index: {}]
  %s3 = inlined_call_operand.vmem [shape: f32[2,1,32], index: 3, kind: input, shape index: {}]
  %s4 = inlined_call_operand.vmem [shape: f32[2,17,32], index: 4, kind: output, shape index: {}]
  %s5 = sld [smem:[#allocation0]]
  $region26: #{tpu_custom_call.1} parent=0
    _
  %s7 = ssub.s32 1, %s5
  %s8 = scalar_select 0, %s7, %s5
  // Predicated region
  $region2: #{tpu_custom_call.1} parent=0 // pred_check
    _
  $region3: #{tpu_custom_call.1} parent=0 // pred_check_branch
    %10 = sbr.rel (0) target = $region5
  $region4: #{tpu_custom_call.1} parent=0 // pred_region
    _
  $region5: #{tpu_custom_call.1} parent=0 // pred_fallthru
    _
  // Predicated region
  $region6: #{tpu_custom_call.1} parent=0 // pred_check
    _
  $region7: #{tpu_custom_call.1} parent=0 // pred_check_branch
    %12 = sbr.rel (0) target = $region9
  $region8: #{tpu_custom_call.1} parent=0 // pred_region
    _
  $region9: #{tpu_custom_call.1} parent=0 // pred_fallthru
    _
  // Predicated region
  $region10: #{tpu_custom_call.1} parent=0 // pred_check
    _
  $region11: #{tpu_custom_call.1} parent=0 // pred_check_branch
    %14 = sbr.rel (0) target = $region13
  $region12: #{tpu_custom_call.1} parent=0 // pred_region
    _
  $region13: #{tpu_custom_call.1} parent=0 // pred_fallthru
    _
  // Predicated region
  $region14: #{tpu_custom_call.1} parent=0 // pred_check
    _
  $region15: #{tpu_custom_call.1} parent=0 // pred_check_branch
    %16 = sbr.rel (0) target = $region17
  $region16: #{tpu_custom_call.1} parent=0 // pred_region
    _
  $region17: #{tpu_custom_call.1} parent=0 // pred_fallthru
    _
  %v17 = vld [vmem:[%s0] sm:$0xff]
  %v18 = vld [vmem:[%s0 + $0x8] sm:$0xff]
  %v19 = vld [vmem:[%s0 + $0x10] sm:$0xff]
  %v20 = vld [vmem:[%s0 + $0x18] sm:$0xff]
  %v21 = vld [vmem:[%s1] sm:$0xff]
  %v22 = vld [vmem:[%s1 + $0x8] sm:$0xff]
  %v23 = vld [vmem:[%s1 + $0x10] sm:$0xff]
  %v24 = vld [vmem:[%s1 + $0x18] sm:$0xff]
  %v25 = vld [vmem:[%s1 + $0x20] sm:$0xff]
  %v26 = vld [vmem:[%s1 + $0x28] sm:$0xff]
  %v27 = vld [vmem:[%s1 + $0x30] sm:$0xff]
  %v28 = vld [vmem:[%s1 + $0x38] sm:$0xff]
  %vm29 = vcmask 523264
  %v31 = vsel %vm29, %v17, 0
  %v34 = vsel %vm29, %v18, 0
  %v37 = vsel %vm29, %v19, 0
  %v40 = vsel %vm29, %v20, 0
  %42 = vmatprep.subr.mxu0 0.0
  %43 = vmatpush1.msra.mxu0 %v21
  %44 = vmatprep.subr.mxu0 0.0
  %45 = vmatpush1.msra.mxu0 %v22
  %46 = vmatprep.subr.mxu0 0.0
  %47 = vmatpush1.msra.mxu0 %v23
  %48 = vmatprep.subr.mxu0 0.0
  %49 = vmatpush1.msra.mxu0 %v24
  %50 = vmatprep.subr.mxu0 0.0
  %51 = vmatpush1.msra.mxu0 %v25
  %52 = vmatprep.subr.mxu0 0.0
  %53 = vmatpush1.msra.mxu0 %v26
  %54 = vmatprep.subr.mxu0 0.0
  %55 = vmatpush1.msra.mxu0 %v27
  %56 = vmatprep.subr.mxu0 0.0
  %57 = vmatpush1.msra.mxu0 %v28
  %58 = vmatprep.subr.mxu0 0.0
  %59 = vmatpush1.msra.mxu0 0.0
  %60 = vmatprep.subr.mxu0 0.0
  %61 = vmatpush1.msra.mxu0 0.0
  %62 = vmatprep.subr.mxu0 0.0
  %63 = vmatpush1.msra.mxu0 0.0
  %64 = vmatprep.subr.mxu0 0.0
  %65 = vmatpush1.msra.mxu0 0.0
  %66 = vmatprep.subr.mxu0 0.0
  %67 = vmatpush1.msra.mxu0 0.0
  %68 = vmatprep.subr.mxu0 0.0
  %69 = vmatpush1.msra.mxu0 0.0
  %70 = vmatprep.subr.mxu0 0.0
  %71 = vmatpush1.msra.mxu0 0.0
  %72 = vmatprep.subr.mxu0 0.0
  %73 = vmatpush1.msra.mxu0 0.0
  %74 = vmatprep.subr.mxu0 0.0
  %75 = vmatpush1.msra.mxu0 0.0
  %76 = vmatprep.subr.mxu0 0.0
  %77 = vmatpush1.msra.mxu0 0.0
  %78 = vmatprep.subr.mxu0 0.0
  %79 = vmatpush1.msra.mxu0 0.0
  %80 = vmatprep.subr.mxu0 0.0
  %81 = vmatpush1.msra.mxu0 0.0
  %82 = vmatprep.subr.mxu0 0.0
  %83 = vmatpush1.msra.mxu0 0.0
  %84 = vmatprep.subr.mxu0 0.0
  %85 = vmatpush1.msra.mxu0 0.0
  %86 = vmatprep.subr.mxu0 0.0
  %87 = vmatpush1.msra.mxu0 0.0
  %88 = vmatprep.subr.mxu0 0.0
  %89 = vmatpush1.msra.mxu0 0.0
  %90 = vmatprep.subr.mxu0 0.0
  %91 = vmatpush1.msra.mxu0 0.0
  %92 = vmatprep.subr.mxu0 0.0
  %93 = vmatpush1.msra.mxu0 0.0
  %94 = vmatprep.subr.mxu0 0.0
  %95 = vmatpush1.msra.mxu0 0.0
  %96 = vmatprep.subr.mxu0 0.0
  %97 = vmatpush1.msra.mxu0 0.0
  %98 = vmatprep.subr.mxu0 0.0
  %99 = vmatpush1.msra.mxu0 0.0
  %100 = vmatprep.subr.mxu0 0.0
  %101 = vmatpush1.msra.mxu0 0.0
  %102 = vmatprep.subr.mxu0 0.0
  %103 = vmatpush1.msra.mxu0 0.0
  %104 = vmatprep.subr.mxu0 0.0
  %105 = vmatpush1.msra.mxu0 0.0
  %106 = vmatprep.mubr.f32.mxu0 0.0
  %107 = vmatmul.mubr.f32.gmra.mrb[0].mxu0 %v31
  %v108 = vpop.f32.mrb[0].mxu0
  %v109 = vadd.f32 0.0, %v108
  %v110 = vpop.f32.mrb[0].mxu0
  %111 = vmatprep.mubr.f32.mxu0 0.0
  %112 = vmatmul.mubr.f32.gmra.mrb[0].mxu0 %v34
  %v113 = vpop.f32.mrb[0].mxu0
  %v114 = vadd.f32 0.0, %v113
  %v115 = vpop.f32.mrb[0].mxu0
  %116 = vmatprep.mubr.f32.mxu0 0.0
  %117 = vmatmul.mubr.f32.gmra.mrb[0].mxu0 %v37
  %v118 = vpop.f32.mrb[0].mxu0
  %v119 = vadd.f32 0.0, %v118
  %v120 = vpop.f32.mrb[0].mxu0
  %121 = vmatprep.mubr.f32.mxu0 0.0
  %122 = vmatmul.mubr.f32.gmra.mrb[0].mxu0 %v40
  %v123 = vpop.f32.mrb[0].mxu0
  %v124 = vadd.f32 0.0, %v123
  %v125 = vpop.f32.mrb[0].mxu0
  %126 = vdwg.mxu0
  %v127 = vld [vmem:[%s2] sm:$0xff]
  %v128 = vld [vmem:[%s2 + $0x8] sm:$0xff]
  %v129 = vadd.f32 %v109, %v127
  %v130 = vadd.f32 %v114, %v128
  %v131 = vadd.f32 %v119, %v127
  %v132 = vadd.f32 %v124, %v128
  %vm133 = vcmask 261120
  %134 = vst.msk [vmem:[%s4] sm:$0xff] %vm133, %v129
  %135 = vst.msk [vmem:[%s4 + $0x8] sm:$0xff] %vm133, %v130
  %136 = vst.msk [vmem:[%s4 + $0x18] sm:$0xff] %vm133, %v131
  %137 = vst.msk [vmem:[%s4 + $0x20] sm:$0xff] %vm133, %v132
  %v138 = vld [vmem:[%s3] sm:$0x1]
  %v139 = vld [vmem:[%s3 + $0x1] sm:$0x1]
  %vm140 = vcmask 253952
  %141 = vst.msk [vmem:[%s4 + $0x10] sm:$0x1] %vm140, %v138
  %142 = vst.msk [vmem:[%s4 + $0x28] sm:$0x1] %vm140, %v139
  // Predicated region
  $region18: #{tpu_custom_call.1} parent=0 // pred_check
    _
  $region19: #{tpu_custom_call.1} parent=0 // pred_check_branch
    %144 = sbr.rel (0) target = $region21
  $region20: #{tpu_custom_call.1} parent=0 // pred_region
    _
  $region21: #{tpu_custom_call.1} parent=0 // pred_fallthru
    _
  // Predicated region
  $region22: #{tpu_custom_call.1} parent=0 // pred_check
    _
  $region23: #{tpu_custom_call.1} parent=0 // pred_check_branch
    %146 = sbr.rel (0) target = $region25
  $region24: #{tpu_custom_call.1} parent=0 // pred_region
    _
  $region25: #{tpu_custom_call.1} parent=0 // pred_fallthru
    _

</llo_original>
